<compile_context>
chip_gen: v5e
topology: v5e:2x2
jax: 0.10.0
libtpu: 0.0.40
codegen_flags: <defaults>
</compile_context>

<pallas_src>
import functools

import jax
import jax.numpy as jnp
import numpy as np
from jax import lax
from jax.experimental import pallas as pl
from jax.experimental.pallas import tpu as pltpu


# ----------------------------------------------------------------------------- kernel
def dilconv_fused_kernel(x_ref, t_ref, gamma_ref, beta_ref, y_ref, *,
                         N, H, WCin, H_out, W_out, Cout, KH,
                         stride, dilation, padding, eps):
    """Fused ReLU + dilated conv + training-mode BatchNorm for the whole batch.

    x_ref    : (N, H, W*Cin)          lane-dense NHWC input rows (unpadded, pre-ReLU)
    t_ref    : (KH, W*Cin, W_out*Cout) per-kh Toeplitz weight slabs (W padding folded in)
    gamma_ref: (1, Cout)              BN affine weight
    beta_ref : (1, Cout)              BN affine bias
    y_ref    : (N*H_out, W_out*Cout)  lane-dense normalized output
    """
    WCout = W_out * Cout

    # ReLU (padding zeros are unaffected by ReLU, so padding after ReLU is fine).
    xr = jnp.maximum(x_ref[...], 0.0)                       # (N, H, W*Cin)

    # Fold the H padding in-kernel (W padding already lives in the Toeplitz slabs).
    if padding > 0:
        zp = jnp.zeros((N, padding, WCin), jnp.float32)
        xp = jnp.concatenate([zp, xr, zp], axis=1)          # (N, H + 2p, W*Cin)
    else:
        xp = xr

    # Dilated conv as KH row-matmuls: for each kh, output row h reads padded input row
    # h*stride + kh*dilation; the W/Cin contraction against the Toeplitz slab lands
    # directly in the lane-dense (w*Cout + c) output layout.
    acc = jnp.zeros((N * H_out, WCout), jnp.float32)
    for kh in range(KH):
        r0 = kh * dilation
        sl = xp[:, r0: r0 + (H_out - 1) * stride + 1: stride, :]   # (N, H_out, W*Cin)
        lhs = sl.reshape(N * H_out, WCin)
        acc = acc + jnp.dot(lhs, t_ref[kh], preferred_element_type=jnp.float32)

    # --- BatchNorm batch statistics (training mode, biased variance). ---------------
    s1 = jnp.sum(acc, axis=0, keepdims=True)                # (1, WCout)
    s2 = jnp.sum(acc * acc, axis=0, keepdims=True)          # (1, WCout)
    moments = jnp.concatenate([s1, s2], axis=0)             # (2, WCout)

    # lane -> channel fold (sum over w inside the packed lanes) as a tiny 0/1 matmul.
    lane_mod = lax.broadcasted_iota(jnp.int32, (WCout, Cout), 0) % Cout
    chan = lax.broadcasted_iota(jnp.int32, (WCout, Cout), 1)
    fold = (lane_mod == chan).astype(jnp.float32)           # (WCout, Cout)
    moments_c = jnp.dot(moments, fold, preferred_element_type=jnp.float32)  # (2, Cout)

    inv_cnt = 1.0 / float(N * H_out * W_out)
    mean = moments_c[0:1, :] * inv_cnt                      # (1, Cout)
    var = moments_c[1:2, :] * inv_cnt - mean * mean         # biased (PyTorch training BN)
    inv_std = lax.rsqrt(var + eps)
    scale = gamma_ref[...] * inv_std                        # (1, Cout)
    shift = beta_ref[...] - mean * scale                    # (1, Cout)

    # channel -> lane expansion (each channel value broadcast to its W_out lanes).
    lane_mod2 = lax.broadcasted_iota(jnp.int32, (Cout, WCout), 1) % Cout
    chan2 = lax.broadcasted_iota(jnp.int32, (Cout, WCout), 0)
    expand = (lane_mod2 == chan2).astype(jnp.float32)       # (Cout, WCout)
    ss = jnp.dot(jnp.concatenate([scale, shift], axis=0), expand,
                 preferred_element_type=jnp.float32)        # (2, WCout)

    y_ref[...] = acc * ss[0:1, :] + ss[1:2, :]              # full-width lane-dense store


# ----------------------------------------------------------------------------- wrapper
def _build_toeplitz(weight_oihw, W, W_out, stride, padding, dilation):
    """Per-kh slabs T[kh, w_in*Cin + cin, w*Cout + c] = W[kh, kw, cin, c] where
    w_in = w*stride + kw*dilation - padding is in range (W padding folded in)."""
    Cout, Cin, KH, KW = weight_oihw.shape
    w_hwio = jnp.transpose(weight_oihw, (2, 3, 1, 0)).astype(jnp.float32)  # (KH,KW,Cin,Cout)

    kh, kw, w, cin, c = np.meshgrid(np.arange(KH), np.arange(KW), np.arange(W_out),
                                    np.arange(Cin), np.arange(Cout), indexing="ij")
    kh, kw, w, cin, c = [a.ravel() for a in (kh, kw, w, cin, c)]
    w_in = w * stride + kw * dilation - padding
    valid = (w_in >= 0) & (w_in < W)
    kh, kw, w, cin, c, w_in = [a[valid] for a in (kh, kw, w, cin, c, w_in)]

    rows = w_in * Cin + cin
    cols = w * Cout + c
    vals = w_hwio[kh, kw, cin, c]                            # (nnz,)
    t = jnp.zeros((KH, W * Cin, W_out * Cout), jnp.float32)
    return t.at[kh, rows, cols].set(vals, unique_indices=True)


def dil_conv(x_nchw, weight_oihw, gamma, beta, *, stride, padding, dilation, eps=1e-5):
    N, Cin, H, W = x_nchw.shape
    Cout, Cin_w, KH, KW = weight_oihw.shape
    assert Cin_w == Cin
    H_out = (H + 2 * padding - dilation * (KH - 1) - 1) // stride + 1
    W_out = (W + 2 * padding - dilation * (KW - 1) - 1) // stride + 1
    WCin = W * Cin
    WCout = W_out * Cout

    # Layout prep (tiny, single fused XLA producer): NCHW -> lane-dense (N, H, W*Cin);
    # weights -> Toeplitz slabs (amortizable weight preprocessing in real use).
    x_flat = jnp.transpose(x_nchw, (0, 2, 3, 1)).astype(jnp.float32).reshape(N, H, WCin)
    t = _build_toeplitz(weight_oihw, W, W_out, stride, padding, dilation)
    g2 = gamma.astype(jnp.float32).reshape(1, Cout)
    b2 = beta.astype(jnp.float32).reshape(1, Cout)

    kern = functools.partial(
        dilconv_fused_kernel, N=N, H=H, WCin=WCin, H_out=H_out, W_out=W_out,
        Cout=Cout, KH=KH, stride=stride, dilation=dilation, padding=padding, eps=eps)

    y_ld = pl.pallas_call(
        kern,
        grid=(1,),
        in_specs=[
            pl.BlockSpec((N, H, WCin), lambda i: (0, 0, 0)),
            pl.BlockSpec((KH, WCin, WCout), lambda i: (0, 0, 0)),
            pl.BlockSpec((1, Cout), lambda i: (0, 0)),
            pl.BlockSpec((1, Cout), lambda i: (0, 0)),
        ],
        out_shape=jax.ShapeDtypeStruct((N * H_out, WCout), jnp.float32),
        out_specs=pl.BlockSpec((N * H_out, WCout), lambda i: (0, 0)),
        compiler_params=pltpu.CompilerParams(dimension_semantics=("arbitrary",)),
    )(x_flat, t, g2, b2)

    # Free reinterpret to (N, H_out, W_out, Cout) + small transpose back to NCHW.
    return jnp.transpose(y_ld.reshape(N, H_out, W_out, Cout), (0, 3, 1, 2))


# ----------------------------------------------------------------------------- reference
def dil_conv_ref(x_nchw, weight_oihw, gamma, beta, *, stride, padding,
                 dilation, eps=1e-5):
    """Pure-JAX reference mirroring the PyTorch module forward."""
    xr = jnp.maximum(x_nchw.astype(jnp.float32), 0.0)
    conv = lax.conv_general_dilated(
        xr, weight_oihw.astype(jnp.float32),
        window_strides=(stride, stride),
        padding=((padding, padding), (padding, padding)),
        rhs_dilation=(dilation, dilation),
        dimension_numbers=("NCHW", "OIHW", "NCHW"))
    mean = jnp.mean(conv, axis=(0, 2, 3), keepdims=True)
    var = jnp.var(conv, axis=(0, 2, 3), keepdims=True)
    return ((conv - mean) * lax.rsqrt(var + eps)
            * gamma[None, :, None, None] + beta[None, :, None, None])


if __name__ == "__main__":
    # Module config: DilConv(C_in=4, C_out=8, kernel_size=3, stride=1,
    #                        padding=2, dilation=2, affine=True)
    C_in, C_out, Ksz, stride, padding, dilation = 4, 8, 3, 1, 2, 2
    N, H, W = 2, 16, 16

    key = jax.random.PRNGKey(0)
    kx, kw, kg, kb = jax.random.split(key, 4)
    x = jax.random.normal(kx, (N, C_in, H, W), dtype=jnp.float32)
    weight = jax.random.normal(kw, (C_out, C_in, Ksz, Ksz), dtype=jnp.float32) * 0.1
    gamma = 1.0 + 0.1 * jax.random.normal(kg, (C_out,), dtype=jnp.float32)
    beta = 0.1 * jax.random.normal(kb, (C_out,), dtype=jnp.float32)

    out = dil_conv(x, weight, gamma, beta, stride=stride, padding=padding,
                   dilation=dilation)
    out = jax.block_until_ready(out)

    ref = dil_conv_ref(x, weight, gamma, beta, stride=stride, padding=padding,
                       dilation=dilation)
    np.testing.assert_allclose(np.asarray(out), np.asarray(ref),
                               rtol=1e-3, atol=1e-3)
    print("KERNEL_OK")
</pallas_src>

<mosaic_0001>
module attributes {stable_mosaic.version = 11 : i64} {
  func.func @dilconv_fused_kernel(%arg0: i32, %arg1: memref<2x16x64xf32, #tpu.memory_space<vmem>>, %arg2: memref<3x64x128xf32, #tpu.memory_space<vmem>>, %arg3: memref<1x8xf32, #tpu.memory_space<vmem>>, %arg4: memref<1x8xf32, #tpu.memory_space<vmem>>, %arg5: memref<32x128xf32, #tpu.memory_space<vmem>>) attributes {dimension_semantics = [#tpu.dimension_semantics<arbitrary>], iteration_bounds = array<i64: 1>, scalar_prefetch = 0 : i64, scratch_operands = 0 : i64, tpu.core_type = #tpu.core_type<tc>, window_params = [{pipeline_mode = #tpu.pipeline_mode<synchronous>, transform_indices = @transform_0, window_bounds = array<i64: 2, 16, 64>}, {pipeline_mode = #tpu.pipeline_mode<synchronous>, transform_indices = @transform_1, window_bounds = array<i64: 3, 64, 128>}, {pipeline_mode = #tpu.pipeline_mode<synchronous>, transform_indices = @transform_2, window_bounds = array<i64: 1, 8>}, {pipeline_mode = #tpu.pipeline_mode<synchronous>, transform_indices = @transform_3, window_bounds = array<i64: 1, 8>}, {pipeline_mode = #tpu.pipeline_mode<synchronous>, transform_indices = @transform_4, window_bounds = array<i64: 32, 128>}]} {
    %c0 = arith.constant 0 : index
    %c0_0 = arith.constant 0 : index
    %c0_1 = arith.constant 0 : index
    %0 = vector.load %arg1[%c0, %c0_0, %c0_1] : memref<2x16x64xf32, #tpu.memory_space<vmem>>, vector<2x16x64xf32>
    %cst = arith.constant 0.000000e+00 : f32
    %1 = vector.broadcast %cst : f32 to vector<2x16x64xf32>
    %2 = arith.maximumf %0, %1 : vector<2x16x64xf32>
    %cst_2 = arith.constant 0.000000e+00 : f32
    %3 = vector.broadcast %cst_2 : f32 to vector<2x2x64xf32>
    %4 = tpu.concatenate %3, %2, %3 in 1 : vector<2x2x64xf32>, vector<2x16x64xf32>, vector<2x2x64xf32> -> vector<2x20x64xf32>
    %cst_3 = arith.constant 0.000000e+00 : f32
    %5 = vector.broadcast %cst_3 : f32 to vector<32x128xf32>
    %6 = vector.extract_strided_slice %4 {offsets = [0, 0, 0], sizes = [2, 16, 64], strides = [1, 1, 1]} : vector<2x20x64xf32> to vector<2x16x64xf32>
    %7 = vector.shape_cast %6 : vector<2x16x64xf32> to vector<32x64xf32>
    %c0_4 = arith.constant 0 : index
    %c0_5 = arith.constant 0 : index
    %c0_6 = arith.constant 0 : index
    %8 = vector.load %arg2[%c0_4, %c0_5, %c0_6] : memref<3x64x128xf32, #tpu.memory_space<vmem>>, vector<1x64x128xf32>
    %9 = vector.shape_cast %8 : vector<1x64x128xf32> to vector<64x128xf32>
    %cst_7 = arith.constant dense<0.000000e+00> : vector<32x128xf32>
    %10 = tpu.matmul %7, %9, %cst_7 {dimension_numbers = #tpu.dot_dimension_numbers<[1], [0], [0], [1], [0, 0, 1, 1], [], []>} : vector<32x64xf32>, vector<64x128xf32>, vector<32x128xf32> -> vector<32x128xf32>
    %11 = arith.addf %5, %10 : vector<32x128xf32>
    %12 = vector.extract_strided_slice %4 {offsets = [0, 2, 0], sizes = [2, 16, 64], strides = [1, 1, 1]} : vector<2x20x64xf32> to vector<2x16x64xf32>
    %13 = vector.shape_cast %12 : vector<2x16x64xf32> to vector<32x64xf32>
    %c1 = arith.constant 1 : index
    %c0_8 = arith.constant 0 : index
    %c0_9 = arith.constant 0 : index
    %14 = vector.load %arg2[%c1, %c0_8, %c0_9] : memref<3x64x128xf32, #tpu.memory_space<vmem>>, vector<1x64x128xf32>
    %15 = vector.shape_cast %14 : vector<1x64x128xf32> to vector<64x128xf32>
    %cst_10 = arith.constant dense<0.000000e+00> : vector<32x128xf32>
    %16 = tpu.matmul %13, %15, %cst_10 {dimension_numbers = #tpu.dot_dimension_numbers<[1], [0], [0], [1], [0, 0, 1, 1], [], []>} : vector<32x64xf32>, vector<64x128xf32>, vector<32x128xf32> -> vector<32x128xf32>
    %17 = arith.addf %11, %16 : vector<32x128xf32>
    %18 = vector.extract_strided_slice %4 {offsets = [0, 4, 0], sizes = [2, 16, 64], strides = [1, 1, 1]} : vector<2x20x64xf32> to vector<2x16x64xf32>
    %19 = vector.shape_cast %18 : vector<2x16x64xf32> to vector<32x64xf32>
    %c2 = arith.constant 2 : index
    %c0_11 = arith.constant 0 : index
    %c0_12 = arith.constant 0 : index
    %20 = vector.load %arg2[%c2, %c0_11, %c0_12] : memref<3x64x128xf32, #tpu.memory_space<vmem>>, vector<1x64x128xf32>
    %21 = vector.shape_cast %20 : vector<1x64x128xf32> to vector<64x128xf32>
    %cst_13 = arith.constant dense<0.000000e+00> : vector<32x128xf32>
    %22 = tpu.matmul %19, %21, %cst_13 {dimension_numbers = #tpu.dot_dimension_numbers<[1], [0], [0], [1], [0, 0, 1, 1], [], []>} : vector<32x64xf32>, vector<64x128xf32>, vector<32x128xf32> -> vector<32x128xf32>
    %23 = arith.addf %17, %22 : vector<32x128xf32>
    %cst_14 = arith.constant dense<0.000000e+00> : vector<128xf32>
    %24 = vector.multi_reduction <add>, %23, %cst_14 [0] : vector<32x128xf32> to vector<128xf32>
    %25 = vector.shape_cast %24 : vector<128xf32> to vector<1x128xf32>
    %26 = arith.mulf %23, %23 : vector<32x128xf32>
    %cst_15 = arith.constant dense<0.000000e+00> : vector<128xf32>
    %27 = vector.multi_reduction <add>, %26, %cst_15 [0] : vector<32x128xf32> to vector<128xf32>
    %28 = vector.shape_cast %27 : vector<128xf32> to vector<1x128xf32>
    %29 = tpu.concatenate %25, %28 in 0 : vector<1x128xf32>, vector<1x128xf32> -> vector<2x128xf32>
    %30 = tpu.iota {dimensions = array<i32: 0>} : vector<128x8xi32>
    %c8_i32 = arith.constant 8 : i32
    %c0_i32 = arith.constant 0 : i32
    %31 = arith.cmpi eq, %c8_i32, %c0_i32 : i32
    %c1_i32 = arith.constant 1 : i32
    %32 = arith.select %31, %c1_i32, %c8_i32 : i32
    %33 = vector.broadcast %32 : i32 to vector<128x8xi32>
    %34 = arith.remsi %30, %33 : vector<128x8xi32>
    %c0_i32_16 = arith.constant 0 : i32
    %35 = vector.broadcast %c0_i32_16 : i32 to vector<128x8xi32>
    %36 = arith.cmpi ne, %34, %35 : vector<128x8xi32>
    %c0_i32_17 = arith.constant 0 : i32
    %37 = vector.broadcast %c0_i32_17 : i32 to vector<128x8xi32>
    %38 = arith.cmpi slt, %34, %37 : vector<128x8xi32>
    %c0_i32_18 = arith.constant 0 : i32
    %39 = arith.cmpi slt, %32, %c0_i32_18 : i32
    %40 = vector.broadcast %39 : i1 to vector<128x8xi1>
    %41 = vector.broadcast %40 : vector<128x8xi1> to vector<128x8xi1>
    %42 = arith.xori %38, %41 : vector<128x8xi1>
    %43 = arith.andi %42, %36 : vector<128x8xi1>
    %44 = vector.broadcast %32 : i32 to vector<128x8xi32>
    %45 = arith.addi %34, %44 : vector<128x8xi32>
    %46 = arith.select %43, %45, %34 : vector<128x8xi1>, vector<128x8xi32>
    %47 = tpu.iota {dimensions = array<i32: 1>} : vector<128x8xi32>
    %48 = arith.cmpi eq, %46, %47 : vector<128x8xi32>
    %49 = arith.extui %48 : vector<128x8xi1> to vector<128x8xi32>
    %50 = arith.sitofp %49 : vector<128x8xi32> to vector<128x8xf32>
    %cst_19 = arith.constant dense<0.000000e+00> : vector<2x8xf32>
    %51 = tpu.matmul %29, %50, %cst_19 {dimension_numbers = #tpu.dot_dimension_numbers<[1], [0], [0], [1], [0, 0, 1, 1], [], []>} : vector<2x128xf32>, vector<128x8xf32>, vector<2x8xf32> -> vector<2x8xf32>
    %52 = vector.extract_strided_slice %51 {offsets = [0, 0], sizes = [1, 8], strides = [1, 1]} : vector<2x8xf32> to vector<1x8xf32>
    %cst_20 = arith.constant 0.001953125 : f32
    %53 = vector.broadcast %cst_20 : f32 to vector<1x8xf32>
    %54 = arith.mulf %52, %53 : vector<1x8xf32>
    %55 = vector.extract_strided_slice %51 {offsets = [1, 0], sizes = [1, 8], strides = [1, 1]} : vector<2x8xf32> to vector<1x8xf32>
    %cst_21 = arith.constant 0.001953125 : f32
    %56 = vector.broadcast %cst_21 : f32 to vector<1x8xf32>
    %57 = arith.mulf %55, %56 : vector<1x8xf32>
    %58 = arith.mulf %54, %54 : vector<1x8xf32>
    %59 = arith.subf %57, %58 : vector<1x8xf32>
    %cst_22 = arith.constant 9.99999974E-6 : f32
    %60 = vector.broadcast %cst_22 : f32 to vector<1x8xf32>
    %61 = arith.addf %59, %60 : vector<1x8xf32>
    %62 = math.rsqrt %61 : vector<1x8xf32>
    %c0_23 = arith.constant 0 : index
    %c0_24 = arith.constant 0 : index
    %63 = vector.load %arg3[%c0_23, %c0_24] : memref<1x8xf32, #tpu.memory_space<vmem>>, vector<1x8xf32>
    %64 = arith.mulf %63, %62 : vector<1x8xf32>
    %c0_25 = arith.constant 0 : index
    %c0_26 = arith.constant 0 : index
    %65 = vector.load %arg4[%c0_25, %c0_26] : memref<1x8xf32, #tpu.memory_space<vmem>>, vector<1x8xf32>
    %66 = arith.mulf %54, %64 : vector<1x8xf32>
    %67 = arith.subf %65, %66 : vector<1x8xf32>
    %68 = tpu.iota {dimensions = array<i32: 1>} : vector<8x128xi32>
    %c8_i32_27 = arith.constant 8 : i32
    %c0_i32_28 = arith.constant 0 : i32
    %69 = arith.cmpi eq, %c8_i32_27, %c0_i32_28 : i32
    %c1_i32_29 = arith.constant 1 : i32
    %70 = arith.select %69, %c1_i32_29, %c8_i32_27 : i32
    %71 = vector.broadcast %70 : i32 to vector<8x128xi32>
    %72 = arith.remsi %68, %71 : vector<8x128xi32>
    %c0_i32_30 = arith.constant 0 : i32
    %73 = vector.broadcast %c0_i32_30 : i32 to vector<8x128xi32>
    %74 = arith.cmpi ne, %72, %73 : vector<8x128xi32>
    %c0_i32_31 = arith.constant 0 : i32
    %75 = vector.broadcast %c0_i32_31 : i32 to vector<8x128xi32>
    %76 = arith.cmpi slt, %72, %75 : vector<8x128xi32>
    %c0_i32_32 = arith.constant 0 : i32
    %77 = arith.cmpi slt, %70, %c0_i32_32 : i32
    %78 = vector.broadcast %77 : i1 to vector<8x128xi1>
    %79 = vector.broadcast %78 : vector<8x128xi1> to vector<8x128xi1>
    %80 = arith.xori %76, %79 : vector<8x128xi1>
    %81 = arith.andi %80, %74 : vector<8x128xi1>
    %82 = vector.broadcast %70 : i32 to vector<8x128xi32>
    %83 = arith.addi %72, %82 : vector<8x128xi32>
    %84 = arith.select %81, %83, %72 : vector<8x128xi1>, vector<8x128xi32>
    %85 = tpu.iota {dimensions = array<i32: 0>} : vector<8x128xi32>
    %86 = arith.cmpi eq, %84, %85 : vector<8x128xi32>
    %87 = arith.extui %86 : vector<8x128xi1> to vector<8x128xi32>
    %88 = arith.sitofp %87 : vector<8x128xi32> to vector<8x128xf32>
    %89 = tpu.concatenate %64, %67 in 0 : vector<1x8xf32>, vector<1x8xf32> -> vector<2x8xf32>
    %cst_33 = arith.constant dense<0.000000e+00> : vector<2x128xf32>
    %90 = tpu.matmul %89, %88, %cst_33 {dimension_numbers = #tpu.dot_dimension_numbers<[1], [0], [0], [1], [0, 0, 1, 1], [], []>} : vector<2x8xf32>, vector<8x128xf32>, vector<2x128xf32> -> vector<2x128xf32>
    %91 = vector.extract_strided_slice %90 {offsets = [0, 0], sizes = [1, 128], strides = [1, 1]} : vector<2x128xf32> to vector<1x128xf32>
    %92 = vector.broadcast %91 : vector<1x128xf32> to vector<32x128xf32>
    %93 = arith.mulf %23, %92 : vector<32x128xf32>
    %94 = vector.extract_strided_slice %90 {offsets = [1, 0], sizes = [1, 128], strides = [1, 1]} : vector<2x128xf32> to vector<1x128xf32>
    %95 = vector.broadcast %94 : vector<1x128xf32> to vector<32x128xf32>
    %96 = arith.addf %93, %95 : vector<32x128xf32>
    %c0_34 = arith.constant 0 : index
    %c0_35 = arith.constant 0 : index
    %97 = vector.load %arg5[%c0_34, %c0_35] : memref<32x128xf32, #tpu.memory_space<vmem>>, vector<32x128xf32>
    tpu.vector_store %arg5[%c0_34, %c0_35], %96 {strides = array<i32>} : memref<32x128xf32, #tpu.memory_space<vmem>>, vector<32x128xf32>,
    return
  }
  func.func @transform_0(%arg0: i32) -> (i32, i32, i32) {
    %c0_i32 = arith.constant 0 : i32
    %c0_i32_0 = arith.constant 0 : i32
    %c0_i32_1 = arith.constant 0 : i32
    %c0_i32_2 = arith.constant 0 : i32
    return %c0_i32, %c0_i32_0, %c0_i32_1 : i32, i32, i32
  }
  func.func @transform_1(%arg0: i32) -> (i32, i32, i32) {
    %c0_i32 = arith.constant 0 : i32
    %c0_i32_0 = arith.constant 0 : i32
    %c0_i32_1 = arith.constant 0 : i32
    %c0_i32_2 = arith.constant 0 : i32
    return %c0_i32, %c0_i32_0, %c0_i32_1 : i32, i32, i32
  }
  func.func @transform_2(%arg0: i32) -> (i32, i32) {
    %c0_i32 = arith.constant 0 : i32
    %c0_i32_0 = arith.constant 0 : i32
    %c0_i32_1 = arith.constant 0 : i32
    return %c0_i32, %c0_i32_0 : i32, i32
  }
  func.func @transform_3(%arg0: i32) -> (i32, i32) {
    %c0_i32 = arith.constant 0 : i32
    %c0_i32_0 = arith.constant 0 : i32
    %c0_i32_1 = arith.constant 0 : i32
    return %c0_i32, %c0_i32_0 : i32, i32
  }
  func.func @transform_4(%arg0: i32) -> (i32, i32) {
    %c0_i32 = arith.constant 0 : i32
    %c0_i32_0 = arith.constant 0 : i32
    %c0_i32_1 = arith.constant 0 : i32
    return %c0_i32, %c0_i32_0 : i32, i32
  }
}

</mosaic_0001>

<llo_original>
// kernel: tpu_custom_call.1
$region0: #{tpu_custom_call.1}
  #allocation0 [shape = 'u32[]', space=smem, size = 0x4, offset = 0x4, fixed_abs, tag = 'smem constant byte address 0x4 - core index']
  #allocation1 [shape = 'u32[72,128]{1,0:T(1,128)}', space=vmem, size = 0x9000, scoped, tag = 'internal scratch']
  %s0 = inlined_call_operand.hbm [shape: f32[2,16,64], index: 0, kind: input, shape index: {}]
  %s1 = inlined_call_operand.hbm [shape: f32[3,64,128], index: 1, kind: input, shape index: {}]
  %s2 = inlined_call_operand.vmem [shape: f32[1,8], index: 2, kind: input, shape index: {}]
  %s3 = inlined_call_operand.vmem [shape: f32[1,8], index: 3, kind: input, shape index: {}]
  %s4 = inlined_call_operand.hbm [shape: f32[32,128], index: 4, kind: output, shape index: {}]
  %s5 = sld [smem:[#allocation0]]
  $region34: #{tpu_custom_call.1} parent=0
    _
  %s7 = ssub.s32 1, %s5
  %s8 = scalar_select 0, %s7, %s5
  $region1: #{tpu_custom_call.1} parent=0
    #allocation2 [shape = 'u8[16384]{0}', space=vmem, size = 0x4000, scoped, tag = 'input window, operand 0, single buffered']
    #allocation3 [shape = 's32[1]{0}', space=sflag, size = 0x4, scoped, tag = 'scoped memory for tpu_custom_call.1']
    #allocation4 [shape = 's32[1]{0}', space=sflag, size = 0x4, scoped, tag = 'scoped memory for tpu_custom_call.1']
    #allocation5 [shape = 'u8[98304]{0}', space=vmem, size = 0x18000, scoped, tag = 'input window, operand 1, single buffered']
    #allocation6 [shape = 's32[1]{0}', space=sflag, size = 0x4, scoped, tag = 'scoped memory for tpu_custom_call.1']
    #allocation7 [shape = 'u8[16384]{0}', space=vmem, size = 0x4000, scoped, tag = 'output window, operand 0, single buffered']
    %9 = vsyncpa [#allocation3], 0
    %10 = vsyncpa [#allocation6], 0
    %11 = vsyncpa [#allocation4], 0
    // Predicated region
    $region2: #{tpu_custom_call.1} parent=1 // pred_check
      _
    $region3: #{tpu_custom_call.1} parent=1 // pred_check_branch
      %13 = sbr.rel (0) target = $region5
    $region4: #{tpu_custom_call.1} parent=1 // pred_region
      %15 = vsyncadd [#allocation3], 0
      %s16 = sshll.u32 %s0, 4
      %s17 = int_to_ptr.hbm [resolvable:$true] %s16
      %s18 = sshll.u32 [#allocation2], 4
      %s19 = int_to_ptr.vmem [resolvable:$true] %s18
      %24 = dma.hbm_to_vmem [thread:$0]  %s17, 512, %s19, [#allocation3], 128, 128, 8
    $region5: #{tpu_custom_call.1} parent=1 // pred_fallthru
      _
    // Predicated region
    $region6: #{tpu_custom_call.1} parent=1 // pred_check
      _
    $region7: #{tpu_custom_call.1} parent=1 // pred_check_branch
      %26 = sbr.rel (0) target = $region9
    $region8: #{tpu_custom_call.1} parent=1 // pred_region
      %28 = vsyncadd [#allocation6], 0
      %s29 = sshll.u32 %s1, 4
      %s30 = int_to_ptr.hbm [resolvable:$true] %s29
      %s31 = sshll.u32 [#allocation5], 4
      %s32 = int_to_ptr.vmem [resolvable:$true] %s31
      %37 = dma.hbm_to_vmem [thread:$0]  %s30, 3072, %s32, [#allocation6], 128, 128, 8
    $region9: #{tpu_custom_call.1} parent=1 // pred_fallthru
      _
    // Predicated region
    $region10: #{tpu_custom_call.1} parent=1 // pred_check
      _
    $region11: #{tpu_custom_call.1} parent=1 // pred_check_branch
      %39 = sbr.rel (0) target = $region13
    $region12: #{tpu_custom_call.1} parent=1 // pred_region
      _
    $region13: #{tpu_custom_call.1} parent=1 // pred_fallthru
      _
    // Predicated region
    $region14: #{tpu_custom_call.1} parent=1 // pred_check
      _
    $region15: #{tpu_custom_call.1} parent=1 // pred_check_branch
      %41 = sbr.rel (0) target = $region17
    $region16: #{tpu_custom_call.1} parent=1 // pred_region
      _
    $region17: #{tpu_custom_call.1} parent=1 // pred_fallthru
      _
    // Predicated region
    $region18: #{tpu_custom_call.1} parent=1 // pred_check
      _
    $region19: #{tpu_custom_call.1} parent=1 // pred_check_branch
      %43 = sbr.rel (0) target = $region21
    $region20: #{tpu_custom_call.1} parent=1 // pred_region
      %45 = dma.done [#allocation3], 512
    $region21: #{tpu_custom_call.1} parent=1 // pred_fallthru
      _
    // Predicated region
    $region22: #{tpu_custom_call.1} parent=1 // pred_check
      _
    $region23: #{tpu_custom_call.1} parent=1 // pred_check_branch
      %47 = sbr.rel (0) target = $region25
    $region24: #{tpu_custom_call.1} parent=1 // pred_region
      %49 = dma.done [#allocation6], 3072
    $region25: #{tpu_custom_call.1} parent=1 // pred_fallthru
      _
    %v50 = vld [vmem:[#allocation2] sm:$0xff]
    %v51 = vld [vmem:[#allocation2 + $0x8] sm:$0xff]
    %v52 = vld [vmem:[#allocation2 + $0x10] sm:$0xff]
    %v53 = vld [vmem:[#allocation2 + $0x18] sm:$0xff]
    %v54 = vmax.f32 %v50, 0.0
    %v55 = vmax.f32 %v51, 0.0
    %v56 = vmax.f32 %v52, 0.0
    %v57 = vmax.f32 %v53, 0.0
    %vm62 = vcmask 1041408
    %v63 = vrot.slane %v54, 6
    %v64 = vrot.slane %v55, 6
    %v65 = vsel %vm62, %v63, %v64
    %v66 = vrot.slane %v56, 6
    %v67 = vrot.slane %v57, 6
    %v68 = vsel %vm62, %v66, %v67
    %v73 = vsel %vm62, 0.0, %v63
    %v74 = vsel %vm62, 0.0, %v66
    %v75 = vsel %vm62, %v64, 0.0
    %v76 = vsel %vm62, %v67, 0.0
    %v77 = vld [vmem:[#allocation5] sm:$0xff]
    %v78 = vld [vmem:[#allocation5 + $0x8] sm:$0xff]
    %v79 = vld [vmem:[#allocation5 + $0x10] sm:$0xff]
    %v80 = vld [vmem:[#allocation5 + $0x18] sm:$0xff]
    %v81 = vld [vmem:[#allocation5 + $0x20] sm:$0xff]
    %v82 = vld [vmem:[#allocation5 + $0x28] sm:$0xff]
    %v83 = vld [vmem:[#allocation5 + $0x30] sm:$0xff]
    %v84 = vld [vmem:[#allocation5 + $0x38] sm:$0xff]
    %vm89 = vcmask 1045504
    %v90 = vrot.slane %v73, 2
    %v91 = vrot.slane %v65, 2
    %v92 = vsel %vm89, %v90, %v91
    %v93 = vrot.slane %v75, 2
    %v94 = vsel %vm89, %v91, %v93
    %v95 = vrot.slane %v74, 2
    %v96 = vrot.slane %v68, 2
    %v97 = vsel %vm89, %v95, %v96
    %v98 = vrot.slane %v76, 2
    %v99 = vsel %vm89, %v96, %v98
    %s100 = scalar_lea.vmem [#allocation5], 64
    %v101 = vld [vmem:[%s100] sm:$0xff]
    %v102 = vld [vmem:[%s100 + $0x8] sm:$0xff]
    %v103 = vld [vmem:[%s100 + $0x10] sm:$0xff]
    %v104 = vld [vmem:[%s100 + $0x18] sm:$0xff]
    %v105 = vld [vmem:[%s100 + $0x20] sm:$0xff]
    %v106 = vld [vmem:[%s100 + $0x28] sm:$0xff]
    %v107 = vld [vmem:[%s100 + $0x30] sm:$0xff]
    %v108 = vld [vmem:[%s100 + $0x38] sm:$0xff]
    %vm109 = vcmask 523264
    %v110 = vsel %vm109, %v92, 0
    %v112 = vsel %vm109, %v94, 0
    %v114 = vsel %vm109, %v97, 0
    %v116 = vsel %vm109, %v99, 0
    %118 = vmatpush.msra.mxu0 0.0
    %119 = vmatpush.msra.mxu0 0.0
    %120 = vmatpush.msra.mxu0 0.0
    %121 = vmatpush.msra.mxu0 0.0
    %122 = vmatpush.msra.mxu0 0.0
    %123 = vmatpush.msra.mxu0 0.0
    %124 = vmatpush.msra.mxu0 0.0
    %125 = vmatpush.msra.mxu0 0.0
    %126 = vmatpush.msra.mxu0 %v108
    %127 = vmatpush.msra.mxu0 %v107
    %128 = vmatpush.msra.mxu0 %v106
    %129 = vmatpush.msra.mxu0 %v105
    %130 = vmatpush.msra.mxu0 %v104
    %131 = vmatpush.msra.mxu0 %v103
    %132 = vmatpush.msra.mxu0 %v102
    %133 = vmatpush.msra.mxu0 %v101
    %134 = vmatmul.f32.gmra.mxu0 %v110
    %v135 = vpop.f32.mrf.mxu0
    %v136 = vadd.f32 0.0, %v135
    %137 = vmatmul.f32.gmra.mxu0 %v112
    %v138 = vpop.f32.mrf.mxu0
    %v139 = vadd.f32 0.0, %v138
    %140 = vmatmul.f32.gmra.mxu0 %v114
    %v141 = vpop.f32.mrf.mxu0
    %v142 = vadd.f32 0.0, %v141
    %143 = vmatmul.f32.gmra.mxu0 %v116
    %v144 = vpop.f32.mrf.mxu0
    %v145 = vadd.f32 0.0, %v144
    %146 = vdwg.mxu0
    %v147 = vsel %vm109, %v73, 0
    %v149 = vsel %vm109, %v65, 0
    %v151 = vsel %vm109, %v74, 0
    %v153 = vsel %vm109, %v68, 0
    %155 = vmatpush.msra.mxu0 0.0
    %156 = vmatpush.msra.mxu0 0.0
    %157 = vmatpush.msra.mxu0 0.0
    %158 = vmatpush.msra.mxu0 0.0
    %159 = vmatpush.msra.mxu0 0.0
    %160 = vmatpush.msra.mxu0 0.0
    %161 = vmatpush.msra.mxu0 0.0
    %162 = vmatpush.msra.mxu0 0.0
    %163 = vmatpush.msra.mxu0 %v84
    %164 = vmatpush.msra.mxu0 %v83
    %165 = vmatpush.msra.mxu0 %v82
    %166 = vmatpush.msra.mxu0 %v81
    %167 = vmatpush.msra.mxu0 %v80
    %168 = vmatpush.msra.mxu0 %v79
    %169 = vmatpush.msra.mxu0 %v78
    %170 = vmatpush.msra.mxu0 %v77
    %171 = vmatmul.f32.gmra.mxu0 %v147
    %v172 = vpop.f32.mrf.mxu0
    %v173 = vadd.f32 %v136, %v172
    %174 = vmatmul.f32.gmra.mxu0 %v149
    %v175 = vpop.f32.mrf.mxu0
    %v176 = vadd.f32 %v139, %v175
    %177 = vmatmul.f32.gmra.mxu0 %v151
    %v178 = vpop.f32.mrf.mxu0
    %v179 = vadd.f32 %v142, %v178
    %180 = vmatmul.f32.gmra.mxu0 %v153
    %v181 = vpop.f32.mrf.mxu0
    %v182 = vadd.f32 %v145, %v181
    %183 = vdwg.mxu0
    %vm184 = vcmask 1043456
    %v185 = vrot.slane %v73, 4
    %v186 = vrot.slane %v65, 4
    %v187 = vsel %vm184, %v185, %v186
    %v188 = vrot.slane %v75, 4
    %v189 = vsel %vm184, %v186, %v188
    %v190 = vrot.slane %v74, 4
    %v191 = vrot.slane %v68, 4
    %v192 = vsel %vm184, %v190, %v191
    %v193 = vrot.slane %v76, 4
    %v194 = vsel %vm184, %v191, %v193
    %s195 = scalar_lea.vmem [#allocation5], 128
    %v196 = vld [vmem:[%s195] sm:$0xff]
    %v197 = vld [vmem:[%s195 + $0x8] sm:$0xff]
    %v198 = vld [vmem:[%s195 + $0x10] sm:$0xff]
    %v199 = vld [vmem:[%s195 + $0x18] sm:$0xff]
    %v200 = vld [vmem:[%s195 + $0x20] sm:$0xff]
    %v201 = vld [vmem:[%s195 + $0x28] sm:$0xff]
    %v202 = vld [vmem:[%s195 + $0x30] sm:$0xff]
    %v203 = vld [vmem:[%s195 + $0x38] sm:$0xff]
    %v204 = vsel %vm109, %v187, 0
    %v206 = vsel %vm109, %v189, 0
    %v208 = vsel %vm109, %v192, 0
    %v210 = vsel %vm109, %v194, 0
    %212 = vmatpush.msra.mxu0 0.0
    %213 = vmatpush.msra.mxu0 0.0
    %214 = vmatpush.msra.mxu0 0.0
    %215 = vmatpush.msra.mxu0 0.0
    %216 = vmatpush.msra.mxu0 0.0
    %217 = vmatpush.msra.mxu0 0.0
    %218 = vmatpush.msra.mxu0 0.0
    %219 = vmatpush.msra.mxu0 0.0
    %220 = vmatpush.msra.mxu0 %v203
    %221 = vmatpush.msra.mxu0 %v202
    %222 = vmatpush.msra.mxu0 %v201
    %223 = vmatpush.msra.mxu0 %v200
    %224 = vmatpush.msra.mxu0 %v199
    %225 = vmatpush.msra.mxu0 %v198
    %226 = vmatpush.msra.mxu0 %v197
    %227 = vmatpush.msra.mxu0 %v196
    %228 = vmatmul.f32.gmra.mxu0 %v204
    %v229 = vpop.f32.mrf.mxu0
    %v230 = vadd.f32 0.0, %v229
    %231 = vmatmul.f32.gmra.mxu0 %v206
    %v232 = vpop.f32.mrf.mxu0
    %v233 = vadd.f32 0.0, %v232
    %234 = vmatmul.f32.gmra.mxu0 %v208
    %v235 = vpop.f32.mrf.mxu0
    %v236 = vadd.f32 0.0, %v235
    %237 = vmatmul.f32.gmra.mxu0 %v210
    %v238 = vpop.f32.mrf.mxu0
    %v239 = vadd.f32 0.0, %v238
    %240 = vdwg.mxu0
    %v241 = vadd.f32 %v173, %v230
    %v242 = vadd.f32 %v176, %v233
    %v243 = vadd.f32 %v179, %v236
    %v244 = vadd.f32 %v182, %v239
    %v245 = vadd.f32 %v241, %v242
    %v246 = vadd.f32 %v245, %v243
    %v247 = vadd.f32 %v246, %v244
    %v248 = vrot.slane %v247, 4
    %v249 = vadd.f32 %v247, %v248
    %v250 = vrot.slane %v249, 2
    %v251 = vadd.f32 %v249, %v250
    %v252 = vrot.slane %v251, 1
    %v253 = vadd.f32 %v251, %v252
    %v254 = vmul.f32 %v241, %v241
    %v255 = vmul.f32 %v242, %v242
    %v256 = vmul.f32 %v243, %v243
    %v257 = vmul.f32 %v244, %v244
    %v258 = vadd.f32 %v254, %v255
    %v259 = vadd.f32 %v258, %v256
    %v260 = vadd.f32 %v259, %v257
    %v261 = vrot.slane %v260, 4
    %v262 = vadd.f32 %v260, %v261
    %v263 = vrot.slane %v262, 2
    %v264 = vadd.f32 %v262, %v263
    %v265 = vrot.slane %v264, 1
    %v266 = vadd.f32 %v264, %v265
    %vm267 = vcmask 1040384
    %v268 = vsel %vm267, %v253, %v266
    %v269 = vlaneseq
    %v270 = vshrl.u32 %v269, 7
    %v271 = vadd.s32 %v270, 8
    %v272 = vadd.s32 %v270, 16
    %v273 = vadd.s32 %v270, 24
    %v274 = vadd.s32 %v270, 32
    %v275 = vadd.s32 %v270, 40
    %v276 = vadd.s32 %v270, 48
    %v277 = vadd.s32 %v270, 56
    %v278 = vadd.s32 %v270, 64
    %v279 = vadd.s32 %v270, 72
    %v280 = vadd.s32 %v270, 80
    %v281 = vadd.s32 %v270, 88
    %v282 = vadd.s32 %v270, 96
    %v283 = vadd.s32 %v270, 104
    %v284 = vadd.s32 %v270, 112
    %v285 = vadd.s32 %v270, 120
    %vm286 = vcmp.lt.s32.totalorder %v270, 0
    %v287 = vsub.s32 0, %v270
    %v288 = vsel %vm286, %v287, %v270
    %v289 = vshrl.u32 %v288, 3
    %v290 = vand.u32 %v288, 7
    %v291 = vsub.s32 0, %v290
    %v292 = vsel %vm286, %v291, %v290
    %vm293 = vcmp.lt.s32.totalorder %v271, 0
    %v294 = vsub.s32 0, %v271
    %v295 = vsel %vm293, %v294, %v271
    %v296 = vshrl.u32 %v295, 3
    %v297 = vand.u32 %v295, 7
    %v298 = vsub.s32 0, %v297
    %v299 = vsel %vm293, %v298, %v297
    %vm300 = vcmp.lt.s32.totalorder %v272, 0
    %v301 = vsub.s32 0, %v272
    %v302 = vsel %vm300, %v301, %v272
    %v303 = vshrl.u32 %v302, 3
    %v304 = vand.u32 %v302, 7
    %v305 = vsub.s32 0, %v304
    %v306 = vsel %vm300, %v305, %v304
    %vm307 = vcmp.lt.s32.totalorder %v273, 0
    %v308 = vsub.s32 0, %v273
    %v309 = vsel %vm307, %v308, %v273
    %v310 = vshrl.u32 %v309, 3
    %v311 = vand.u32 %v309, 7
    %v312 = vsub.s32 0, %v311
    %v313 = vsel %vm307, %v312, %v311
    %vm314 = vcmp.lt.s32.totalorder %v274, 0
    %v315 = vsub.s32 0, %v274
    %v316 = vsel %vm314, %v315, %v274
    %v317 = vshrl.u32 %v316, 3
    %v318 = vand.u32 %v316, 7
    %v319 = vsub.s32 0, %v318
    %v320 = vsel %vm314, %v319, %v318
    %vm321 = vcmp.lt.s32.totalorder %v275, 0
    %v322 = vsub.s32 0, %v275
    %v323 = vsel %vm321, %v322, %v275
    %v324 = vshrl.u32 %v323, 3
    %v325 = vand.u32 %v323, 7
    %v326 = vsub.s32 0, %v325
    %v327 = vsel %vm321, %v326, %v325
    %vm328 = vcmp.lt.s32.totalorder %v276, 0
    %v329 = vsub.s32 0, %v276
    %v330 = vsel %vm328, %v329, %v276
    %v331 = vshrl.u32 %v330, 3
    %v332 = vand.u32 %v330, 7
    %v333 = vsub.s32 0, %v332
    %v334 = vsel %vm328, %v333, %v332
    %vm335 = vcmp.lt.s32.totalorder %v277, 0
    %v336 = vsub.s32 0, %v277
    %v337 = vsel %vm335, %v336, %v277
    %v338 = vshrl.u32 %v337, 3
    %v339 = vand.u32 %v337, 7
    %v340 = vsub.s32 0, %v339
    %v341 = vsel %vm335, %v340, %v339
    %vm342 = vcmp.lt.s32.totalorder %v278, 0
    %v343 = vsub.s32 0, %v278
    %v344 = vsel %vm342, %v343, %v278
    %v345 = vshrl.u32 %v344, 3
    %v346 = vand.u32 %v344, 7
    %v347 = vsub.s32 0, %v346
    %v348 = vsel %vm342, %v347, %v346
    %vm349 = vcmp.lt.s32.totalorder %v279, 0
    %v350 = vsub.s32 0, %v279
    %v351 = vsel %vm349, %v350, %v279
    %v352 = vshrl.u32 %v351, 3
    %v353 = vand.u32 %v351, 7
    %v354 = vsub.s32 0, %v353
    %v355 = vsel %vm349, %v354, %v353
    %vm356 = vcmp.lt.s32.totalorder %v280, 0
    %v357 = vsub.s32 0, %v280
    %v358 = vsel %vm356, %v357, %v280
    %v359 = vshrl.u32 %v358, 3
    %v360 = vand.u32 %v358, 7
    %v361 = vsub.s32 0, %v360
    %v362 = vsel %vm356, %v361, %v360
    %vm363 = vcmp.lt.s32.totalorder %v281, 0
    %v364 = vsub.s32 0, %v281
    %v365 = vsel %vm363, %v364, %v281
    %v366 = vshrl.u32 %v365, 3
    %v367 = vand.u32 %v365, 7
    %v368 = vsub.s32 0, %v367
    %v369 = vsel %vm363, %v368, %v367
    %vm370 = vcmp.lt.s32.totalorder %v282, 0
    %v371 = vsub.s32 0, %v282
    %v372 = vsel %vm370, %v371, %v282
    %v373 = vshrl.u32 %v372, 3
    %v374 = vand.u32 %v372, 7
    %v375 = vsub.s32 0, %v374
    %v376 = vsel %vm370, %v375, %v374
    %vm377 = vcmp.lt.s32.totalorder %v283, 0
    %v378 = vsub.s32 0, %v283
    %v379 = vsel %vm377, %v378, %v283
    %v380 = vshrl.u32 %v379, 3
    %v381 = vand.u32 %v379, 7
    %v382 = vsub.s32 0, %v381
    %v383 = vsel %vm377, %v382, %v381
    %vm384 = vcmp.lt.s32.totalorder %v284, 0
    %v385 = vsub.s32 0, %v284
    %v386 = vsel %vm384, %v385, %v284
    %v387 = vshrl.u32 %v386, 3
    %v388 = vand.u32 %v386, 7
    %v389 = vsub.s32 0, %v388
    %v390 = vsel %vm384, %v389, %v388
    %vm391 = vcmp.lt.s32.totalorder %v285, 0
    %v392 = vsub.s32 0, %v285
    %v393 = vsel %vm391, %v392, %v285
    %v394 = vshrl.u32 %v393, 3
    %v395 = vand.u32 %v393, 7
    %v396 = vsub.s32 0, %v395
    %v397 = vsel %vm391, %v396, %v395
    %vm398 = vcmp.ne.s32.totalorder %v292, 0
    %vm399 = vcmp.ne.s32.totalorder %v299, 0
    %vm400 = vcmp.ne.s32.totalorder %v306, 0
    %vm401 = vcmp.ne.s32.totalorder %v313, 0
    %vm402 = vcmp.ne.s32.totalorder %v320, 0
    %vm403 = vcmp.ne.s32.totalorder %v327, 0
    %vm404 = vcmp.ne.s32.totalorder %v334, 0
    %vm405 = vcmp.ne.s32.totalorder %v341, 0
    %vm406 = vcmp.ne.s32.totalorder %v348, 0
    %vm407 = vcmp.ne.s32.totalorder %v355, 0
    %vm408 = vcmp.ne.s32.totalorder %v362, 0
    %vm409 = vcmp.ne.s32.totalorder %v369, 0
    %vm410 = vcmp.ne.s32.totalorder %v376, 0
    %vm411 = vcmp.ne.s32.totalorder %v383, 0
    %vm412 = vcmp.ne.s32.totalorder %v390, 0
    %vm413 = vcmp.ne.s32.totalorder %v397, 0
    %vm414 = vcmp.lt.s32.totalorder %v292, 0
    %vm415 = vcmp.lt.s32.totalorder %v299, 0
    %vm416 = vcmp.lt.s32.totalorder %v306, 0
    %vm417 = vcmp.lt.s32.totalorder %v313, 0
    %vm418 = vcmp.lt.s32.totalorder %v320, 0
    %vm419 = vcmp.lt.s32.totalorder %v327, 0
    %vm420 = vcmp.lt.s32.totalorder %v334, 0
    %vm421 = vcmp.lt.s32.totalorder %v341, 0
    %vm422 = vcmp.lt.s32.totalorder %v348, 0
    %vm423 = vcmp.lt.s32.totalorder %v355, 0
    %vm424 = vcmp.lt.s32.totalorder %v362, 0
    %vm425 = vcmp.lt.s32.totalorder %v369, 0
    %vm426 = vcmp.lt.s32.totalorder %v376, 0
    %vm427 = vcmp.lt.s32.totalorder %v383, 0
    %vm428 = vcmp.lt.s32.totalorder %v390, 0
    %vm429 = vcmp.lt.s32.totalorder %v397, 0
    %vm430 = vmand %vm414, %vm398
    %vm431 = vmand %vm415, %vm399
    %vm432 = vmand %vm416, %vm400
    %vm433 = vmand %vm417, %vm401
    %vm434 = vmand %vm418, %vm402
    %vm435 = vmand %vm419, %vm403
    %vm436 = vmand %vm420, %vm404
    %vm437 = vmand %vm421, %vm405
    %vm438 = vmand %vm422, %vm406
    %vm439 = vmand %vm423, %vm407
    %vm440 = vmand %vm424, %vm408
    %vm441 = vmand %vm425, %vm409
    %vm442 = vmand %vm426, %vm410
    %vm443 = vmand %vm427, %vm411
    %vm444 = vmand %vm428, %vm412
    %vm445 = vmand %vm429, %vm413
    %v446 = vadd.s32 %v292, 8
    %v447 = vadd.s32 %v299, 8
    %v448 = vadd.s32 %v306, 8
    %v449 = vadd.s32 %v313, 8
    %v450 = vadd.s32 %v320, 8
    %v451 = vadd.s32 %v327, 8
    %v452 = vadd.s32 %v334, 8
    %v453 = vadd.s32 %v341, 8
    %v454 = vadd.s32 %v348, 8
    %v455 = vadd.s32 %v355, 8
    %v456 = vadd.s32 %v362, 8
    %v457 = vadd.s32 %v369, 8
    %v458 = vadd.s32 %v376, 8
    %v459 = vadd.s32 %v383, 8
    %v460 = vadd.s32 %v390, 8
    %v461 = vadd.s32 %v397, 8
    %v462 = vsel %vm430, %v446, %v292
    %v463 = vsel %vm431, %v447, %v299
    %v464 = vsel %vm432, %v448, %v306
    %v465 = vsel %vm433, %v449, %v313
    %v466 = vsel %vm434, %v450, %v320
    %v467 = vsel %vm435, %v451, %v327
    %v468 = vsel %vm436, %v452, %v334
    %v469 = vsel %vm437, %v453, %v341
    %v470 = vsel %vm438, %v454, %v348
    %v471 = vsel %vm439, %v455, %v355
    %v472 = vsel %vm440, %v456, %v362
    %v473 = vsel %vm441, %v457, %v369
    %v474 = vsel %vm442, %v458, %v376
    %v475 = vsel %vm443, %v459, %v383
    %v476 = vsel %vm444, %v460, %v390
    %v477 = vsel %vm445, %v461, %v397
    %v478 = vlaneseq
    %v479 = vand.u32 %v478, 127
    %vm480 = vcmp.eq.s32.totalorder %v462, %v479
    %vm481 = vcmp.eq.s32.totalorder %v463, %v479
    %vm482 = vcmp.eq.s32.totalorder %v464, %v479
    %vm483 = vcmp.eq.s32.totalorder %v465, %v479
    %vm484 = vcmp.eq.s32.totalorder %v466, %v479
    %vm485 = vcmp.eq.s32.totalorder %v467, %v479
    %vm486 = vcmp.eq.s32.totalorder %v468, %v479
    %vm487 = vcmp.eq.s32.totalorder %v469, %v479
    %vm488 = vcmp.eq.s32.totalorder %v470, %v479
    %vm489 = vcmp.eq.s32.totalorder %v471, %v479
    %vm490 = vcmp.eq.s32.totalorder %v472, %v479
    %vm491 = vcmp.eq.s32.totalorder %v473, %v479
    %vm492 = vcmp.eq.s32.totalorder %v474, %v479
    %vm493 = vcmp.eq.s32.totalorder %v475, %v479
    %vm494 = vcmp.eq.s32.totalorder %v476, %v479
    %vm495 = vcmp.eq.s32.totalorder %v477, %v479
    %v496 = vsel %vm480, 1, 0
    %v497 = vsel %vm481, 1, 0
    %v498 = vsel %vm482, 1, 0
    %v499 = vsel %vm483, 1, 0
    %v500 = vsel %vm484, 1, 0
    %v501 = vsel %vm485, 1, 0
    %v502 = vsel %vm486, 1, 0
    %v503 = vsel %vm487, 1, 0
    %v504 = vsel %vm488, 1, 0
    %v505 = vsel %vm489, 1, 0
    %v506 = vsel %vm490, 1, 0
    %v507 = vsel %vm491, 1, 0
    %v508 = vsel %vm492, 1, 0
    %v509 = vsel %vm493, 1, 0
    %v510 = vsel %vm494, 1, 0
    %v511 = vsel %vm495, 1, 0
    %v512 = vcvt.s32.f32 %v496
    %v513 = vcvt.s32.f32 %v497
    %v514 = vcvt.s32.f32 %v498
    %v515 = vcvt.s32.f32 %v499
    %v516 = vcvt.s32.f32 %v500
    %v517 = vcvt.s32.f32 %v501
    %v518 = vcvt.s32.f32 %v502
    %v519 = vcvt.s32.f32 %v503
    %v520 = vcvt.s32.f32 %v504
    %v521 = vcvt.s32.f32 %v505
    %v522 = vcvt.s32.f32 %v506
    %v523 = vcvt.s32.f32 %v507
    %v524 = vcvt.s32.f32 %v508
    %v525 = vcvt.s32.f32 %v509
    %v526 = vcvt.s32.f32 %v510
    %v527 = vcvt.s32.f32 %v511
    %528 = vmatpush.msra.mxu0 %v527
    %529 = vmatpush.msra.mxu0 %v526
    %530 = vmatpush.msra.mxu0 %v525
    %531 = vmatpush.msra.mxu0 %v524
    %532 = vmatpush.msra.mxu0 %v523
    %533 = vmatpush.msra.mxu0 %v522
    %534 = vmatpush.msra.mxu0 %v521
    %535 = vmatpush.msra.mxu0 %v520
    %536 = vmatpush.msra.mxu0 %v519
    %537 = vmatpush.msra.mxu0 %v518
    %538 = vmatpush.msra.mxu0 %v517
    %539 = vmatpush.msra.mxu0 %v516
    %540 = vmatpush.msra.mxu0 %v515
    %541 = vmatpush.msra.mxu0 %v514
    %542 = vmatpush.msra.mxu0 %v513
    %543 = vmatpush.msra.mxu0 %v512
    %544 = vmatmul.f32.gmra.mxu0 %v268
    %v545 = vpop.f32.mrf.mxu0
    %v546 = vadd.f32 0.0, %v545
    %547 = vdwg.mxu0
    %v548 = vmul.f32 %v546, 0.001953125
    %v549 = vmul.f32 %v548, %v548
    %v551 = vrot.slane %v549, 7
    %v553 = vsub.f32 %v548, %v551
    %v554 = vadd.f32 %v553, 1e-05
    %v555 = vrsqrt.pop %v554
    %v556 = vmul.f32 %v555, %v554
    %v557 = vmul.f32 %v556, %v555
    %v558 = vmul.f32 0.5, %v557
    %v559 = vsub.f32 1.5, %v558
    %v560 = vmul.f32 %v555, %v559
    %vm561 = vweird.f32 %v554
    %vm562 = vweird.f32 %v555
    %vm563 = vmor %vm561, %vm562
    %v564 = vsel %vm563, %v555, %v560
    %v565 = vld [vmem:[%s2] sm:$0x1]
    %567 = vst [vmem:[#allocation1] sm:$0xff] %v564
    %s568 = scalar_lea.vmem [#allocation1], 1
    %v569 = vld [vmem:[%s568] ss:$9 sm:$0xff]
    %v571 = vmul.f32 %v565, %v569
    %v572 = vld [vmem:[%s3] sm:$0x1]
    %v573 = vmul.f32 %v548, %v571
    %v574 = vsub.f32 %v572, %v573
    %vm575 = vcmp.lt.s32.totalorder %v479, 0
    %v576 = vsub.s32 0, %v479
    %v577 = vsel %vm575, %v576, %v479
    %v578 = vshrl.u32 %v577, 3
    %v579 = vand.u32 %v577, 7
    %v580 = vsub.s32 0, %v579
    %v581 = vsel %vm575, %v580, %v579
    %vm582 = vcmp.ne.s32.totalorder %v581, 0
    %vm583 = vcmp.lt.s32.totalorder %v581, 0
    %vm584 = vmand %vm583, %vm582
    %v585 = vadd.s32 %v581, 8
    %v586 = vsel %vm584, %v585, %v581
    %vm587 = vcmp.eq.s32.totalorder %v586, %v270
    %v588 = vsel %vm587, 1, 0
    %v589 = vcvt.s32.f32 %v588
    %v591 = vperm.slane %v574, 0
    %v593 = vsel %vm267, %v571, %v591
    %vm594 = vcmask 64512
    %v596 = vsel %vm594, %v593, 0
    %598 = vmatpush.msra.mxu0 0.0
    %599 = vmatpush.msra.mxu0 0.0
    %600 = vmatpush.msra.mxu0 0.0
    %601 = vmatpush.msra.mxu0 0.0
    %602 = vmatpush.msra.mxu0 0.0
    %603 = vmatpush.msra.mxu0 0.0
    %604 = vmatpush.msra.mxu0 0.0
    %605 = vmatpush.msra.mxu0 0.0
    %606 = vmatpush.msra.mxu0 0.0
    %607 = vmatpush.msra.mxu0 0.0
    %608 = vmatpush.msra.mxu0 0.0
    %609 = vmatpush.msra.mxu0 0.0
    %610 = vmatpush.msra.mxu0 0.0
    %611 = vmatpush.msra.mxu0 0.0
    %612 = vmatpush.msra.mxu0 0.0
    %613 = vmatpush.msra.mxu0 %v589
    %614 = vmatmul.f32.gmra.mxu0 %v596
    %v615 = vpop.f32.mrf.mxu0
    %v616 = vadd.f32 0.0, %v615
    %617 = vdwg.mxu0
    %v618 = vperm.slane %v616, 0
    %v619 = vmul.f32 %v241, %v618
    %v620 = vmul.f32 %v242, %v618
    %v621 = vmul.f32 %v243, %v618
    %v622 = vmul.f32 %v244, %v618
    %v623 = vperm.slane %v616, 1
    %v624 = vadd.f32 %v619, %v623
    %v625 = vadd.f32 %v620, %v623
    %v626 = vadd.f32 %v621, %v623
    %v627 = vadd.f32 %v622, %v623
    %628 = vst [vmem:[#allocation7] sm:$0xff] %v624
    %629 = vst [vmem:[#allocation7 + $0x8] sm:$0xff] %v625
    %630 = vst [vmem:[#allocation7 + $0x10] sm:$0xff] %v626
    %631 = vst [vmem:[#allocation7 + $0x18] sm:$0xff] %v627
    // Predicated region
    $region26: #{tpu_custom_call.1} parent=1 // pred_check
      _
    $region27: #{tpu_custom_call.1} parent=1 // pred_check_branch
      %633 = sbr.rel (0) target = $region29
    $region28: #{tpu_custom_call.1} parent=1 // pred_region
      %635 = vsyncadd [#allocation4], 0
      %s636 = sshll.u32 [#allocation7], 4
      %s637 = int_to_ptr.vmem [resolvable:$true] %s636
      %s638 = sshll.u32 %s4, 4
      %s639 = int_to_ptr.hbm [resolvable:$true] %s638
      %644 = dma.vmem_to_hbm [thread:$0]  %s637, 512, %s639, [#allocation4], 128, 128, 8
    $region29: #{tpu_custom_call.1} parent=1 // pred_fallthru
      _
    // Predicated region
    $region30: #{tpu_custom_call.1} parent=1 // pred_check
      _
    $region31: #{tpu_custom_call.1} parent=1 // pred_check_branch
      %646 = sbr.rel (0) target = $region33
    $region32: #{tpu_custom_call.1} parent=1 // pred_region
      %648 = dma.done [#allocation4], 512
    $region33: #{tpu_custom_call.1} parent=1 // pred_fallthru
      _
    %649 = vsyncpa [#allocation3], 1
    %650 = vsyncpa [#allocation6], 1
    %651 = vsyncpa [#allocation4], 1

</llo_original>
